<compile_context>
chip_gen: v7x
topology: tpu7x:2x2x1
jax: 0.10.0
libtpu: 0.0.40
codegen_flags: <defaults>
</compile_context>

<pallas_src>
import functools

import jax
import jax.numpy as jnp
from jax.experimental import pallas as pl
from jax.experimental.pallas import tpu as pltpu


# ----------------------------- bias-slab row layout --------------------------
_B_COMP, _B_R, _B_Z, _B_IN, _B_HN, _B4, _GAMMA, _BETA = range(8)


def stage1_kernel(img_ref, txt_ref, hx_ref, w_ref, b_ref, out_ref, hx_out_ref,
                  *, d_real, dp):
    """Fused Stage1 forward.

    w_ref : (dp, 9*dp) weight slab, column blocks:
        [0,dp)      W_img = W1@W3a@W4     (fused affine front end)
        [dp,2dp)    W_txt = W2@W3b@W4
        [2dp,5dp)   W_i   = [Wir|Wiz|Win] (fused GRU input weights)
        [5dp,8dp)   W_h   = [Whr|Whz|Whn] (fused GRU hidden weights)
        [8dp,9dp)   W4
    b_ref : (8, dp) f32 bias slab (rows: b_comp, b_r, b_z, b_in, b_hn, b4, gamma, beta)
    Padded lanes (>= d_real) of every slab row/column are zero, so padded lanes
    of every intermediate value stay exactly zero.
    """
    f32 = jnp.float32
    inv_d = f32(1.0 / d_real)
    eps = f32(1e-5)
    wd = w_ref.dtype                       # f32 or bf16 weights

    gamma = b_ref[_GAMMA:_GAMMA + 1, :]
    beta = b_ref[_BETA:_BETA + 1, :]

    def ln(x):
        # one-pass LayerNorm; sums normalized by the *real* feature count
        mu = jnp.sum(x, axis=-1, keepdims=True) * inv_d
        var = jnp.sum(x * x, axis=-1, keepdims=True) * inv_d - mu * mu
        return (x - mu) * jax.lax.rsqrt(var + eps) * gamma + beta

    hx = hx_ref[...]

    # fused affine front end: linear_1 / linear_2 / cat / linear_3 / linear_4
    t4 = (jnp.dot(img_ref[...].astype(wd), w_ref[:, 0:dp],
                  preferred_element_type=f32)
          + jnp.dot(txt_ref[...].astype(wd), w_ref[:, dp:2 * dp],
                    preferred_element_type=f32)
          + b_ref[_B_COMP:_B_COMP + 1, :])
    tn = ln(t4)

    # fused GRUCell: two wide matmuls instead of six
    i_all = jnp.dot(tn.astype(wd), w_ref[:, 2 * dp:5 * dp],
                    preferred_element_type=f32)
    h_all = jnp.dot(hx.astype(wd), w_ref[:, 5 * dp:8 * dp],
                    preferred_element_type=f32)

    r = jax.nn.sigmoid(i_all[:, 0:dp] + h_all[:, 0:dp]
                       + b_ref[_B_R:_B_R + 1, :])
    z = jax.nn.sigmoid(i_all[:, dp:2 * dp] + h_all[:, dp:2 * dp]
                       + b_ref[_B_Z:_B_Z + 1, :])
    n = jnp.tanh(i_all[:, 2 * dp:3 * dp] + b_ref[_B_IN:_B_IN + 1, :]
                 + r * (h_all[:, 2 * dp:3 * dp] + b_ref[_B_HN:_B_HN + 1, :]))
    h_new = (1.0 - z) * n + z * hx

    # hx = norm(h_new); x = linear_4(hx); out = norm(x)
    hx_n = ln(h_new)
    x = (jnp.dot(hx_n.astype(wd), w_ref[:, 8 * dp:9 * dp],
                 preferred_element_type=f32)
         + b_ref[_B4:_B4 + 1, :])
    out_ref[...] = ln(x)
    hx_out_ref[...] = hx_n


@functools.partial(jax.jit, static_argnames=("d_real", "tile_b"))
def stage1_forward(img, txt, reward, hx, wslab, bslab, *, d_real, tile_b=8):
    # `reward` is accepted but unused, matching the PyTorch forward().
    del reward
    bp, dp = img.shape
    kernel = functools.partial(stage1_kernel, d_real=d_real, dp=dp)
    act_spec = pl.BlockSpec((tile_b, dp), lambda i: (i, 0))
    out, hx_new = pl.pallas_call(
        kernel,
        out_shape=(jax.ShapeDtypeStruct((bp, dp), jnp.float32),
                   jax.ShapeDtypeStruct((bp, dp), jnp.float32)),
        grid_spec=pltpu.PrefetchScalarGridSpec(
            num_scalar_prefetch=0,
            grid=(bp // tile_b,),
            in_specs=[
                act_spec, act_spec, act_spec,
                pl.BlockSpec(wslab.shape, lambda i: (0, 0)),  # weights stay resident
                pl.BlockSpec(bslab.shape, lambda i: (0, 0)),  # bias slab stays resident
            ],
            out_specs=(act_spec, act_spec),
        ),
        compiler_params=pltpu.CompilerParams(
            dimension_semantics=("parallel",),   # batch tiles shard across TCs on v7x
            vmem_limit_bytes=32 * 1024 * 1024,   # explicit VMEM budget (v7x-safe)
        ),
    )(img, txt, hx, wslab, bslab)
    return out, hx_new


# ------------------------------ parameter packing ----------------------------
def _pad2(x, rows, cols):
    r, c = x.shape
    return jnp.pad(x, ((0, rows - r), (0, cols - c)))


def pack_params(p, d, dp, weight_dtype=jnp.float32):
    """Compose + zero-pad the per-layer parameters into one weight slab and one bias slab."""
    # Fully-affine front end (no nonlinearity between linear_1/2, linear_3, linear_4):
    #   t4 = img @ (W1 W3a W4) + txt @ (W2 W3b W4) + ((b1 W3a + b2 W3b + b3) W4 + b4)
    w_img = p["w1"] @ p["w3a"] @ p["w4"]
    w_txt = p["w2"] @ p["w3b"] @ p["w4"]
    b_comp = (p["b1"] @ p["w3a"] + p["b2"] @ p["w3b"] + p["b3"]) @ p["w4"] + p["b4"]

    pw = lambda w: _pad2(w, dp, dp)
    pb = lambda b: _pad2(b, 1, dp)

    wslab = jnp.concatenate(
        [pw(w_img), pw(w_txt),
         pw(p["wir"]), pw(p["wiz"]), pw(p["win"]),     # W_i
         pw(p["whr"]), pw(p["whz"]), pw(p["whn"]),     # W_h
         pw(p["w4"])],
        axis=1).astype(weight_dtype)

    bslab = jnp.concatenate(
        [pb(b_comp),
         pb(p["bir"] + p["bhr"]),      # r-gate bias (mergeable)
         pb(p["biz"] + p["bhz"]),      # z-gate bias (mergeable)
         pb(p["bin"]),
         pb(p["bhn"]),                 # must stay inside r * ( . )
         pb(p["b4"]),
         pb(p["gamma"]),
         pb(p["beta"])],
        axis=0).astype(jnp.float32)
    return wslab, bslab


def init_params(key, hid_dim):
    D = hid_dim
    ks = jax.random.split(key, 16)
    s = 1.0 / jnp.sqrt(jnp.float32(D))

    def w(k, shape):
        return (jax.random.normal(k, shape, jnp.float32) * s).astype(jnp.float32)

    return dict(
        w1=w(ks[0], (D, D)), b1=w(ks[1], (1, D)),
        w2=w(ks[2], (D, D)), b2=w(ks[3], (1, D)),
        w3a=w(ks[4], (D, D)), w3b=w(ks[5], (D, D)), b3=w(ks[6], (1, D)),
        w4=w(ks[7], (D, D)), b4=w(ks[8], (1, D)),
        wir=w(ks[9], (D, D)), wiz=w(ks[10], (D, D)), win=w(ks[11], (D, D)),
        whr=w(ks[12], (D, D)), whz=w(ks[13], (D, D)), whn=w(ks[14], (D, D)),
        bir=w(ks[15], (1, D)) * 0.5, biz=w(ks[15], (1, D)) * 0.25,
        bin=w(ks[15], (1, D)) * 0.125,
        bhr=w(ks[15], (1, D)) * 0.0625, bhz=w(ks[15], (1, D)) * 0.03125,
        bhn=w(ks[15], (1, D)) * 0.015625,
        gamma=jnp.ones((1, D), jnp.float32),   # LayerNorm default weight
        beta=jnp.zeros((1, D), jnp.float32),   # LayerNorm default bias
    )


# -------------------------------- pure-JAX reference -------------------------
def _layer_norm_ref(x, gamma, beta, eps=1e-5):
    mu = jnp.mean(x, axis=-1, keepdims=True)
    var = jnp.mean((x - mu) ** 2, axis=-1, keepdims=True)
    return (x - mu) * jax.lax.rsqrt(var + eps) * gamma + beta


def reference_forward(img, txt, hx, p):
    def ln(x):
        return _layer_norm_ref(x, p["gamma"], p["beta"])
    img1 = img @ p["w1"] + p["b1"]
    txt1 = txt @ p["w2"] + p["b2"]
    t = jnp.concatenate([img1, txt1], axis=1)
    w3 = jnp.concatenate([p["w3a"], p["w3b"]], axis=0)
    t3 = t @ w3 + p["b3"]
    tn = ln(t3 @ p["w4"] + p["b4"])
    r = jax.nn.sigmoid(tn @ p["wir"] + p["bir"] + hx @ p["whr"] + p["bhr"])
    z = jax.nn.sigmoid(tn @ p["wiz"] + p["biz"] + hx @ p["whz"] + p["bhz"])
    n = jnp.tanh(tn @ p["win"] + p["bin"] + r * (hx @ p["whn"] + p["bhn"]))
    h_new = (1.0 - z) * n + z * hx
    hx_n = ln(h_new)
    out = ln(hx_n @ p["w4"] + p["b4"])
    return out, hx_n


if __name__ == "__main__":
    B, D = 2, 32        # batch, hid_dim implied by the module
    BP, DP = 8, 128     # padded to f32 sublane / lane granularity (lane-dense layout)

    key = jax.random.PRNGKey(0)
    k_img, k_txt, k_rew, k_par = jax.random.split(key, 4)

    img = jax.random.normal(k_img, (B, D), jnp.float32)
    txt = jax.random.normal(k_txt, (B, D), jnp.float32)
    reward = jax.random.normal(k_rew, (B, 1), jnp.float32)  # unused in forward
    hx = jnp.zeros((B, D), jnp.float32)                     # init_hid()

    params = init_params(k_par, D)

    img_p, txt_p, hx_p = (_pad2(a, BP, DP) for a in (img, txt, hx))

    # exact f32-weight path (v5e-friendly); verify against unfused reference
    wslab, bslab = pack_params(params, D, DP, weight_dtype=jnp.float32)
    out_p, hx_new_p = stage1_forward(img_p, txt_p, reward, hx_p, wslab, bslab,
                                     d_real=D)
    jax.block_until_ready((out_p, hx_new_p))
    out, hx_new = out_p[:B, :D], hx_new_p[:B, :D]

    out_ref, hx_ref = reference_forward(img, txt, hx, params)
    assert jnp.allclose(out, out_ref, atol=1e-4, rtol=1e-4), "output mismatch"
    assert jnp.allclose(hx_new, hx_ref, atol=1e-4, rtol=1e-4), "hidden mismatch"

    # bf16-weight variant (MXU-native on v6e/v7x, halves weight HBM/VMEM traffic);
    # activations / gates / LayerNorm remain f32 inside the kernel.
    wslab16, bslab16 = pack_params(params, D, DP, weight_dtype=jnp.bfloat16)
    out16_p, hx16_p = stage1_forward(img_p, txt_p, reward, hx_p, wslab16, bslab16,
                                     d_real=D)
    jax.block_until_ready((out16_p, hx16_p))
    assert bool(jnp.isfinite(out16_p).all()) and bool(jnp.isfinite(hx16_p).all())

    print("KERNEL_OK")
</pallas_src>

<mosaic_0001>
module attributes {stable_mosaic.version = 11 : i64} {
  func.func @stage1_kernel(%arg0: i32, %arg1: memref<8x128xf32, #tpu.memory_space<vmem>>, %arg2: memref<8x128xf32, #tpu.memory_space<vmem>>, %arg3: memref<8x128xf32, #tpu.memory_space<vmem>>, %arg4: memref<128x1152xf32, #tpu.memory_space<vmem>>, %arg5: memref<8x128xf32, #tpu.memory_space<vmem>>, %arg6: memref<8x128xf32, #tpu.memory_space<vmem>>, %arg7: memref<8x128xf32, #tpu.memory_space<vmem>>) attributes {dimension_semantics = [#tpu.dimension_semantics<parallel>], iteration_bounds = array<i64: 1>, scalar_prefetch = 0 : i64, scratch_operands = 0 : i64, tpu.core_type = #tpu.core_type<tc>, window_params = [{transform_indices = @transform_0, window_bounds = array<i64: 8, 128>}, {transform_indices = @transform_1, window_bounds = array<i64: 8, 128>}, {transform_indices = @transform_2, window_bounds = array<i64: 8, 128>}, {pipeline_mode = #tpu.pipeline_mode<synchronous>, transform_indices = @transform_3, window_bounds = array<i64: 128, 1152>}, {pipeline_mode = #tpu.pipeline_mode<synchronous>, transform_indices = @transform_4, window_bounds = array<i64: 8, 128>}, {transform_indices = @transform_5, window_bounds = array<i64: 8, 128>}, {transform_indices = @transform_6, window_bounds = array<i64: 8, 128>}]} {
    %c6 = arith.constant 6 : index
    %c0 = arith.constant 0 : index
    %0 = vector.load %arg5[%c6, %c0] : memref<8x128xf32, #tpu.memory_space<vmem>>, vector<1x128xf32>
    %c7 = arith.constant 7 : index
    %c0_0 = arith.constant 0 : index
    %1 = vector.load %arg5[%c7, %c0_0] : memref<8x128xf32, #tpu.memory_space<vmem>>, vector<1x128xf32>
    %c0_1 = arith.constant 0 : index
    %c0_2 = arith.constant 0 : index
    %2 = vector.load %arg3[%c0_1, %c0_2] : memref<8x128xf32, #tpu.memory_space<vmem>>, vector<8x128xf32>
    %c0_3 = arith.constant 0 : index
    %c0_4 = arith.constant 0 : index
    %3 = vector.load %arg1[%c0_3, %c0_4] : memref<8x128xf32, #tpu.memory_space<vmem>>, vector<8x128xf32>
    %c0_5 = arith.constant 0 : index
    %c0_6 = arith.constant 0 : index
    %4 = vector.load %arg4[%c0_5, %c0_6] : memref<128x1152xf32, #tpu.memory_space<vmem>>, vector<128x128xf32>
    %cst = arith.constant dense<0.000000e+00> : vector<8x128xf32>
    %5 = tpu.matmul %3, %4, %cst {dimension_numbers = #tpu.dot_dimension_numbers<[1], [0], [0], [1], [0, 0, 1, 1], [], []>} : vector<8x128xf32>, vector<128x128xf32>, vector<8x128xf32> -> vector<8x128xf32>
    %c0_7 = arith.constant 0 : index
    %c0_8 = arith.constant 0 : index
    %6 = vector.load %arg2[%c0_7, %c0_8] : memref<8x128xf32, #tpu.memory_space<vmem>>, vector<8x128xf32>
    %c0_9 = arith.constant 0 : index
    %c128 = arith.constant 128 : index
    %7 = vector.load %arg4[%c0_9, %c128] : memref<128x1152xf32, #tpu.memory_space<vmem>>, vector<128x128xf32>
    %cst_10 = arith.constant dense<0.000000e+00> : vector<8x128xf32>
    %8 = tpu.matmul %6, %7, %cst_10 {dimension_numbers = #tpu.dot_dimension_numbers<[1], [0], [0], [1], [0, 0, 1, 1], [], []>} : vector<8x128xf32>, vector<128x128xf32>, vector<8x128xf32> -> vector<8x128xf32>
    %9 = arith.addf %5, %8 : vector<8x128xf32>
    %c0_11 = arith.constant 0 : index
    %c0_12 = arith.constant 0 : index
    %10 = vector.load %arg5[%c0_11, %c0_12] : memref<8x128xf32, #tpu.memory_space<vmem>>, vector<1x128xf32>
    %11 = vector.broadcast %10 : vector<1x128xf32> to vector<8x128xf32>
    %12 = arith.addf %9, %11 : vector<8x128xf32>
    %cst_13 = arith.constant dense<0.000000e+00> : vector<8xf32>
    %13 = vector.multi_reduction <add>, %12, %cst_13 [1] : vector<8x128xf32> to vector<8xf32>
    %14 = vector.shape_cast %13 : vector<8xf32> to vector<8x1xf32>
    %cst_14 = arith.constant 3.125000e-02 : f32
    %15 = vector.broadcast %cst_14 : f32 to vector<8x1xf32>
    %16 = arith.mulf %14, %15 : vector<8x1xf32>
    %17 = arith.mulf %12, %12 : vector<8x128xf32>
    %cst_15 = arith.constant dense<0.000000e+00> : vector<8xf32>
    %18 = vector.multi_reduction <add>, %17, %cst_15 [1] : vector<8x128xf32> to vector<8xf32>
    %19 = vector.shape_cast %18 : vector<8xf32> to vector<8x1xf32>
    %cst_16 = arith.constant 3.125000e-02 : f32
    %20 = vector.broadcast %cst_16 : f32 to vector<8x1xf32>
    %21 = arith.mulf %19, %20 : vector<8x1xf32>
    %22 = arith.mulf %16, %16 : vector<8x1xf32>
    %23 = arith.subf %21, %22 : vector<8x1xf32>
    %24 = vector.broadcast %16 : vector<8x1xf32> to vector<8x128xf32>
    %25 = arith.subf %12, %24 : vector<8x128xf32>
    %cst_17 = arith.constant 9.99999974E-6 : f32
    %26 = vector.broadcast %cst_17 : f32 to vector<8x1xf32>
    %27 = arith.addf %23, %26 : vector<8x1xf32>
    %28 = math.rsqrt %27 : vector<8x1xf32>
    %29 = vector.broadcast %28 : vector<8x1xf32> to vector<8x128xf32>
    %30 = arith.mulf %25, %29 : vector<8x128xf32>
    %31 = vector.broadcast %0 : vector<1x128xf32> to vector<8x128xf32>
    %32 = arith.mulf %30, %31 : vector<8x128xf32>
    %33 = vector.broadcast %1 : vector<1x128xf32> to vector<8x128xf32>
    %34 = arith.addf %32, %33 : vector<8x128xf32>
    %c0_18 = arith.constant 0 : index
    %c256 = arith.constant 256 : index
    %35 = vector.load %arg4[%c0_18, %c256] : memref<128x1152xf32, #tpu.memory_space<vmem>>, vector<128x384xf32>
    %cst_19 = arith.constant dense<0.000000e+00> : vector<8x384xf32>
    %36 = tpu.matmul %34, %35, %cst_19 {dimension_numbers = #tpu.dot_dimension_numbers<[1], [0], [0], [1], [0, 0, 1, 1], [], []>} : vector<8x128xf32>, vector<128x384xf32>, vector<8x384xf32> -> vector<8x384xf32>
    %c0_20 = arith.constant 0 : index
    %c640 = arith.constant 640 : index
    %37 = vector.load %arg4[%c0_20, %c640] : memref<128x1152xf32, #tpu.memory_space<vmem>>, vector<128x384xf32>
    %cst_21 = arith.constant dense<0.000000e+00> : vector<8x384xf32>
    %38 = tpu.matmul %2, %37, %cst_21 {dimension_numbers = #tpu.dot_dimension_numbers<[1], [0], [0], [1], [0, 0, 1, 1], [], []>} : vector<8x128xf32>, vector<128x384xf32>, vector<8x384xf32> -> vector<8x384xf32>
    %39 = vector.extract_strided_slice %36 {offsets = [0, 0], sizes = [8, 128], strides = [1, 1]} : vector<8x384xf32> to vector<8x128xf32>
    %40 = vector.extract_strided_slice %38 {offsets = [0, 0], sizes = [8, 128], strides = [1, 1]} : vector<8x384xf32> to vector<8x128xf32>
    %41 = arith.addf %39, %40 : vector<8x128xf32>
    %c1 = arith.constant 1 : index
    %c0_22 = arith.constant 0 : index
    %42 = vector.load %arg5[%c1, %c0_22] : memref<8x128xf32, #tpu.memory_space<vmem>>, vector<1x128xf32>
    %43 = vector.broadcast %42 : vector<1x128xf32> to vector<8x128xf32>
    %44 = arith.addf %41, %43 : vector<8x128xf32>
    %45 = arith.negf %44 : vector<8x128xf32>
    %46 = math.exp %45 : vector<8x128xf32>
    %cst_23 = arith.constant 1.000000e+00 : f32
    %47 = vector.broadcast %cst_23 : f32 to vector<8x128xf32>
    %48 = arith.addf %47, %46 : vector<8x128xf32>
    %49 = arith.divf %47, %48 : vector<8x128xf32>
    %50 = vector.extract_strided_slice %36 {offsets = [0, 128], sizes = [8, 128], strides = [1, 1]} : vector<8x384xf32> to vector<8x128xf32>
    %51 = vector.extract_strided_slice %38 {offsets = [0, 128], sizes = [8, 128], strides = [1, 1]} : vector<8x384xf32> to vector<8x128xf32>
    %52 = arith.addf %50, %51 : vector<8x128xf32>
    %c2 = arith.constant 2 : index
    %c0_24 = arith.constant 0 : index
    %53 = vector.load %arg5[%c2, %c0_24] : memref<8x128xf32, #tpu.memory_space<vmem>>, vector<1x128xf32>
    %54 = vector.broadcast %53 : vector<1x128xf32> to vector<8x128xf32>
    %55 = arith.addf %52, %54 : vector<8x128xf32>
    %56 = arith.negf %55 : vector<8x128xf32>
    %57 = math.exp %56 : vector<8x128xf32>
    %cst_25 = arith.constant 1.000000e+00 : f32
    %58 = vector.broadcast %cst_25 : f32 to vector<8x128xf32>
    %59 = arith.addf %58, %57 : vector<8x128xf32>
    %60 = arith.divf %58, %59 : vector<8x128xf32>
    %61 = vector.extract_strided_slice %36 {offsets = [0, 256], sizes = [8, 128], strides = [1, 1]} : vector<8x384xf32> to vector<8x128xf32>
    %c3 = arith.constant 3 : index
    %c0_26 = arith.constant 0 : index
    %62 = vector.load %arg5[%c3, %c0_26] : memref<8x128xf32, #tpu.memory_space<vmem>>, vector<1x128xf32>
    %63 = vector.broadcast %62 : vector<1x128xf32> to vector<8x128xf32>
    %64 = arith.addf %61, %63 : vector<8x128xf32>
    %65 = vector.extract_strided_slice %38 {offsets = [0, 256], sizes = [8, 128], strides = [1, 1]} : vector<8x384xf32> to vector<8x128xf32>
    %c4 = arith.constant 4 : index
    %c0_27 = arith.constant 0 : index
    %66 = vector.load %arg5[%c4, %c0_27] : memref<8x128xf32, #tpu.memory_space<vmem>>, vector<1x128xf32>
    %67 = vector.broadcast %66 : vector<1x128xf32> to vector<8x128xf32>
    %68 = arith.addf %65, %67 : vector<8x128xf32>
    %69 = arith.mulf %49, %68 : vector<8x128xf32>
    %70 = arith.addf %64, %69 : vector<8x128xf32>
    %71 = math.tanh %70 : vector<8x128xf32>
    %cst_28 = arith.constant 1.000000e+00 : f32
    %72 = vector.broadcast %cst_28 : f32 to vector<8x128xf32>
    %73 = arith.subf %72, %60 : vector<8x128xf32>
    %74 = arith.mulf %73, %71 : vector<8x128xf32>
    %75 = arith.mulf %60, %2 : vector<8x128xf32>
    %76 = arith.addf %74, %75 : vector<8x128xf32>
    %cst_29 = arith.constant dense<0.000000e+00> : vector<8xf32>
    %77 = vector.multi_reduction <add>, %76, %cst_29 [1] : vector<8x128xf32> to vector<8xf32>
    %78 = vector.shape_cast %77 : vector<8xf32> to vector<8x1xf32>
    %cst_30 = arith.constant 3.125000e-02 : f32
    %79 = vector.broadcast %cst_30 : f32 to vector<8x1xf32>
    %80 = arith.mulf %78, %79 : vector<8x1xf32>
    %81 = arith.mulf %76, %76 : vector<8x128xf32>
    %cst_31 = arith.constant dense<0.000000e+00> : vector<8xf32>
    %82 = vector.multi_reduction <add>, %81, %cst_31 [1] : vector<8x128xf32> to vector<8xf32>
    %83 = vector.shape_cast %82 : vector<8xf32> to vector<8x1xf32>
    %cst_32 = arith.constant 3.125000e-02 : f32
    %84 = vector.broadcast %cst_32 : f32 to vector<8x1xf32>
    %85 = arith.mulf %83, %84 : vector<8x1xf32>
    %86 = arith.mulf %80, %80 : vector<8x1xf32>
    %87 = arith.subf %85, %86 : vector<8x1xf32>
    %88 = vector.broadcast %80 : vector<8x1xf32> to vector<8x128xf32>
    %89 = arith.subf %76, %88 : vector<8x128xf32>
    %cst_33 = arith.constant 9.99999974E-6 : f32
    %90 = vector.broadcast %cst_33 : f32 to vector<8x1xf32>
    %91 = arith.addf %87, %90 : vector<8x1xf32>
    %92 = math.rsqrt %91 : vector<8x1xf32>
    %93 = vector.broadcast %92 : vector<8x1xf32> to vector<8x128xf32>
    %94 = arith.mulf %89, %93 : vector<8x128xf32>
    %95 = vector.broadcast %0 : vector<1x128xf32> to vector<8x128xf32>
    %96 = arith.mulf %94, %95 : vector<8x128xf32>
    %97 = vector.broadcast %1 : vector<1x128xf32> to vector<8x128xf32>
    %98 = arith.addf %96, %97 : vector<8x128xf32>
    %c0_34 = arith.constant 0 : index
    %c1024 = arith.constant 1024 : index
    %99 = vector.load %arg4[%c0_34, %c1024] : memref<128x1152xf32, #tpu.memory_space<vmem>>, vector<128x128xf32>
    %cst_35 = arith.constant dense<0.000000e+00> : vector<8x128xf32>
    %100 = tpu.matmul %98, %99, %cst_35 {dimension_numbers = #tpu.dot_dimension_numbers<[1], [0], [0], [1], [0, 0, 1, 1], [], []>} : vector<8x128xf32>, vector<128x128xf32>, vector<8x128xf32> -> vector<8x128xf32>
    %c5 = arith.constant 5 : index
    %c0_36 = arith.constant 0 : index
    %101 = vector.load %arg5[%c5, %c0_36] : memref<8x128xf32, #tpu.memory_space<vmem>>, vector<1x128xf32>
    %102 = vector.broadcast %101 : vector<1x128xf32> to vector<8x128xf32>
    %103 = arith.addf %100, %102 : vector<8x128xf32>
    %cst_37 = arith.constant dense<0.000000e+00> : vector<8xf32>
    %104 = vector.multi_reduction <add>, %103, %cst_37 [1] : vector<8x128xf32> to vector<8xf32>
    %105 = vector.shape_cast %104 : vector<8xf32> to vector<8x1xf32>
    %cst_38 = arith.constant 3.125000e-02 : f32
    %106 = vector.broadcast %cst_38 : f32 to vector<8x1xf32>
    %107 = arith.mulf %105, %106 : vector<8x1xf32>
    %108 = arith.mulf %103, %103 : vector<8x128xf32>
    %cst_39 = arith.constant dense<0.000000e+00> : vector<8xf32>
    %109 = vector.multi_reduction <add>, %108, %cst_39 [1] : vector<8x128xf32> to vector<8xf32>
    %110 = vector.shape_cast %109 : vector<8xf32> to vector<8x1xf32>
    %cst_40 = arith.constant 3.125000e-02 : f32
    %111 = vector.broadcast %cst_40 : f32 to vector<8x1xf32>
    %112 = arith.mulf %110, %111 : vector<8x1xf32>
    %113 = arith.mulf %107, %107 : vector<8x1xf32>
    %114 = arith.subf %112, %113 : vector<8x1xf32>
    %115 = vector.broadcast %107 : vector<8x1xf32> to vector<8x128xf32>
    %116 = arith.subf %103, %115 : vector<8x128xf32>
    %cst_41 = arith.constant 9.99999974E-6 : f32
    %117 = vector.broadcast %cst_41 : f32 to vector<8x1xf32>
    %118 = arith.addf %114, %117 : vector<8x1xf32>
    %119 = math.rsqrt %118 : vector<8x1xf32>
    %120 = vector.broadcast %119 : vector<8x1xf32> to vector<8x128xf32>
    %121 = arith.mulf %116, %120 : vector<8x128xf32>
    %122 = vector.broadcast %0 : vector<1x128xf32> to vector<8x128xf32>
    %123 = arith.mulf %121, %122 : vector<8x128xf32>
    %124 = vector.broadcast %1 : vector<1x128xf32> to vector<8x128xf32>
    %125 = arith.addf %123, %124 : vector<8x128xf32>
    %c0_42 = arith.constant 0 : index
    %c0_43 = arith.constant 0 : index
    %126 = vector.load %arg6[%c0_42, %c0_43] : memref<8x128xf32, #tpu.memory_space<vmem>>, vector<8x128xf32>
    tpu.vector_store %arg6[%c0_42, %c0_43], %125 {strides = array<i32>} : memref<8x128xf32, #tpu.memory_space<vmem>>, vector<8x128xf32>,
    %c0_44 = arith.constant 0 : index
    %c0_45 = arith.constant 0 : index
    %127 = vector.load %arg7[%c0_44, %c0_45] : memref<8x128xf32, #tpu.memory_space<vmem>>, vector<8x128xf32>
    tpu.vector_store %arg7[%c0_44, %c0_45], %98 {strides = array<i32>} : memref<8x128xf32, #tpu.memory_space<vmem>>, vector<8x128xf32>,
    return
  }
  func.func @transform_0(%arg0: i32) -> (i32, i32) {
    %c0_i32 = arith.constant 0 : i32
    %c0_i32_0 = arith.constant 0 : i32
    return %arg0, %c0_i32 : i32, i32
  }
  func.func @transform_1(%arg0: i32) -> (i32, i32) {
    %c0_i32 = arith.constant 0 : i32
    %c0_i32_0 = arith.constant 0 : i32
    return %arg0, %c0_i32 : i32, i32
  }
  func.func @transform_2(%arg0: i32) -> (i32, i32) {
    %c0_i32 = arith.constant 0 : i32
    %c0_i32_0 = arith.constant 0 : i32
    return %arg0, %c0_i32 : i32, i32
  }
  func.func @transform_3(%arg0: i32) -> (i32, i32) {
    %c0_i32 = arith.constant 0 : i32
    %c0_i32_0 = arith.constant 0 : i32
    %c0_i32_1 = arith.constant 0 : i32
    return %c0_i32, %c0_i32_0 : i32, i32
  }
  func.func @transform_4(%arg0: i32) -> (i32, i32) {
    %c0_i32 = arith.constant 0 : i32
    %c0_i32_0 = arith.constant 0 : i32
    %c0_i32_1 = arith.constant 0 : i32
    return %c0_i32, %c0_i32_0 : i32, i32
  }
  func.func @transform_5(%arg0: i32) -> (i32, i32) {
    %c0_i32 = arith.constant 0 : i32
    %c0_i32_0 = arith.constant 0 : i32
    return %arg0, %c0_i32 : i32, i32
  }
  func.func @transform_6(%arg0: i32) -> (i32, i32) {
    %c0_i32 = arith.constant 0 : i32
    %c0_i32_0 = arith.constant 0 : i32
    return %arg0, %c0_i32 : i32, i32
  }
}

</mosaic_0001>

<llo_original>
// kernel: stage1_forward.1
$region0: #{stage1_forward.1}
  #allocation0 [shape = 'u32[]', space=smem, size = 0x4, offset = 0x4, fixed_abs, tag = 'smem constant byte address 0x4 - core index']
  #allocation1 [shape = 'u32[144,128]{1,0:T(1,128)}', space=vmem, size = 0x12000, scoped, tag = 'internal scratch']
  %s0 = inlined_call_operand.hbm [shape: f32[8,128], index: 0, kind: input, shape index: {}]
  %s1 = inlined_call_operand.hbm [shape: f32[8,128], index: 1, kind: input, shape index: {}]
  %s2 = inlined_call_operand.hbm [shape: f32[8,128], index: 2, kind: input, shape index: {}]
  %s3 = inlined_call_operand.hbm [shape: f32[128,1152], index: 3, kind: input, shape index: {}]
  %s4 = inlined_call_operand.vmem [shape: f32[8,128], index: 4, kind: input, shape index: {}]
  %s5 = inlined_call_operand.hbm [shape: f32[8,128], index: 5, kind: output, shape index: {0}]
  %s6 = inlined_call_operand.hbm [shape: f32[8,128], index: 6, kind: output, shape index: {1}]
  %7 = xla_tuple %s5, %s6
  %s8 = sld [smem:[#allocation0]]
  $region54: #{stage1_forward.1} parent=0
    _
  %s10 = ssub.s32 1, %s8
  %s11 = scalar_select 0, %s10, %s8
  $region1: #{stage1_forward.1} parent=0
    #allocation2 [shape = 'u8[4096]{0}', space=vmem, size = 0x1000, scoped, tag = 'input window, operand 0, single buffered']
    #allocation3 [shape = 's32[1]{0}', space=sflag, size = 0x4, scoped, tag = 'scoped memory for stage1_forward.1']
    #allocation4 [shape = 's32[1]{0}', space=sflag, size = 0x4, scoped, tag = 'scoped memory for stage1_forward.1']
    #allocation5 [shape = 'u8[4096]{0}', space=vmem, size = 0x1000, scoped, tag = 'input window, operand 1, single buffered']
    #allocation6 [shape = 's32[1]{0}', space=sflag, size = 0x4, scoped, tag = 'scoped memory for stage1_forward.1']
    #allocation7 [shape = 'u8[4096]{0}', space=vmem, size = 0x1000, scoped, tag = 'input window, operand 2, single buffered']
    #allocation8 [shape = 'u8[589824]{0}', space=vmem, size = 0x90000, scoped, tag = 'input window, operand 3, single buffered']
    #allocation9 [shape = 's32[1]{0}', space=sflag, size = 0x4, scoped, tag = 'scoped memory for stage1_forward.1']
    #allocation10 [shape = 'u8[4096]{0}', space=vmem, size = 0x1000, scoped, tag = 'output window, operand 0, single buffered']
    #allocation11 [shape = 'u8[4096]{0}', space=vmem, size = 0x1000, scoped, tag = 'output window, operand 1, single buffered']
    #allocation12 [shape = 's32[1]{0}', space=sflag, size = 0x4, scoped, tag = 'scoped memory for stage1_forward.1']
    %12 = vsyncpa [#allocation3], 0
    %13 = vsyncpa [#allocation6], 0
    %14 = vsyncpa [#allocation9], 0
    %15 = vsyncpa [#allocation4], 0
    %16 = vsyncpa [#allocation12], 0
    // Predicated region
    $region2: #{stage1_forward.1} parent=1 // pred_check
      _
    $region3: #{stage1_forward.1} parent=1 // pred_check_branch
      %18 = sbr.rel (0) target = $region5
    $region4: #{stage1_forward.1} parent=1 // pred_region
      %s20 = ssub.s32 128, 128
      %21 = vsyncadd [#allocation3], %s20
      %s23 = sshll.u32 [#allocation2], 4
      %s24 = int_to_ptr.vmem [resolvable:$true] %s23
      %26 = dma.hbm_to_vmem [thread:$0]  %s0, 128, %s24, [#allocation3]
    $region5: #{stage1_forward.1} parent=1 // pred_fallthru
      _
    // Predicated region
    $region6: #{stage1_forward.1} parent=1 // pred_check
      _
    $region7: #{stage1_forward.1} parent=1 // pred_check_branch
      %28 = sbr.rel (0) target = $region9
    $region8: #{stage1_forward.1} parent=1 // pred_region
      %s30 = ssub.s32 128, 128
      %31 = vsyncadd [#allocation6], %s30
      %s33 = sshll.u32 [#allocation5], 4
      %s34 = int_to_ptr.vmem [resolvable:$true] %s33
      %36 = dma.hbm_to_vmem [thread:$0]  %s1, 128, %s34, [#allocation6]
    $region9: #{stage1_forward.1} parent=1 // pred_fallthru
      _
    // Predicated region
    $region10: #{stage1_forward.1} parent=1 // pred_check
      _
    $region11: #{stage1_forward.1} parent=1 // pred_check_branch
      %38 = sbr.rel (0) target = $region13
    $region12: #{stage1_forward.1} parent=1 // pred_region
      %s40 = ssub.s32 128, 128
      %41 = vsyncadd [#allocation6], %s40
      %s43 = sshll.u32 [#allocation7], 4
      %s44 = int_to_ptr.vmem [resolvable:$true] %s43
      %46 = dma.hbm_to_vmem [thread:$0]  %s2, 128, %s44, [#allocation6]
    $region13: #{stage1_forward.1} parent=1 // pred_fallthru
      _
    // Predicated region
    $region14: #{stage1_forward.1} parent=1 // pred_check
      _
    $region15: #{stage1_forward.1} parent=1 // pred_check_branch
      %48 = sbr.rel (0) target = $region17
    $region16: #{stage1_forward.1} parent=1 // pred_region
      %s50 = ssub.s32 18432, 18432
      %51 = vsyncadd [#allocation9], %s50
      %s52 = sshll.u32 [#allocation8], 4
      %s53 = int_to_ptr.vmem [resolvable:$true] %s52
      %58 = dma.hbm_to_vmem [thread:$0]  %s3, 18432, %s53, [#allocation9], 1152, 1152, 72
    $region17: #{stage1_forward.1} parent=1 // pred_fallthru
      _
    // Predicated region
    $region18: #{stage1_forward.1} parent=1 // pred_check
      _
    $region19: #{stage1_forward.1} parent=1 // pred_check_branch
      %60 = sbr.rel (0) target = $region21
    $region20: #{stage1_forward.1} parent=1 // pred_region
      _
    $region21: #{stage1_forward.1} parent=1 // pred_fallthru
      _
    // Predicated region
    $region22: #{stage1_forward.1} parent=1 // pred_check
      _
    $region23: #{stage1_forward.1} parent=1 // pred_check_branch
      %62 = sbr.rel (0) target = $region25
    $region24: #{stage1_forward.1} parent=1 // pred_region
      %63 = dma.done [#allocation3], 128
    $region25: #{stage1_forward.1} parent=1 // pred_fallthru
      _
    // Predicated region
    $region26: #{stage1_forward.1} parent=1 // pred_check
      _
    $region27: #{stage1_forward.1} parent=1 // pred_check_branch
      %65 = sbr.rel (0) target = $region29
    $region28: #{stage1_forward.1} parent=1 // pred_region
      %66 = dma.done [#allocation6], 128
    $region29: #{stage1_forward.1} parent=1 // pred_fallthru
      _
    // Predicated region
    $region30: #{stage1_forward.1} parent=1 // pred_check
      _
    $region31: #{stage1_forward.1} parent=1 // pred_check_branch
      %68 = sbr.rel (0) target = $region33
    $region32: #{stage1_forward.1} parent=1 // pred_region
      %69 = dma.done [#allocation6], 128
    $region33: #{stage1_forward.1} parent=1 // pred_fallthru
      _
    // Predicated region
    $region34: #{stage1_forward.1} parent=1 // pred_check
      _
    $region35: #{stage1_forward.1} parent=1 // pred_check_branch
      %71 = sbr.rel (0) target = $region37
    $region36: #{stage1_forward.1} parent=1 // pred_region
      %72 = dma.done [#allocation9], 18432
    $region37: #{stage1_forward.1} parent=1 // pred_fallthru
      _
    %v73 = vld [vmem:[%s4 + $0x6] sm:$0x1]
    %v74 = vld [vmem:[%s4 + $0x7] sm:$0x1]
    %v75 = vld [vmem:[#allocation7] sm:$0xff]
    %v76 = vld [vmem:[#allocation2] sm:$0xff]
    %v77 = vld [vmem:[#allocation8] sm:$0xff]
    %v78 = vld [vmem:[#allocation8 + $0x48] sm:$0xff]
    %v79 = vld [vmem:[#allocation8 + $0x90] sm:$0xff]
    %v80 = vld [vmem:[#allocation8 + $0xd8] sm:$0xff]
    %v81 = vld [vmem:[#allocation8 + $0x120] sm:$0xff]
    %v82 = vld [vmem:[#allocation8 + $0x168] sm:$0xff]
    %v83 = vld [vmem:[#allocation8 + $0x1b0] sm:$0xff]
    %v84 = vld [vmem:[#allocation8 + $0x1f8] sm:$0xff]
    %v85 = vld [vmem:[#allocation8 + $0x240] sm:$0xff]
    %v86 = vld [vmem:[#allocation8 + $0x288] sm:$0xff]
    %v87 = vld [vmem:[#allocation8 + $0x2d0] sm:$0xff]
    %v88 = vld [vmem:[#allocation8 + $0x318] sm:$0xff]
    %v89 = vld [vmem:[#allocation8 + $0x360] sm:$0xff]
    %v90 = vld [vmem:[#allocation8 + $0x3a8] sm:$0xff]
    %v91 = vld [vmem:[#allocation8 + $0x3f0] sm:$0xff]
    %v92 = vld [vmem:[#allocation8 + $0x438] sm:$0xff]
    %v93 = vld [vmem:[#allocation5] sm:$0xff]
    %v94 = vld [vmem:[#allocation8 + $0x8] sm:$0xff]
    %v95 = vld [vmem:[#allocation8 + $0x50] sm:$0xff]
    %v96 = vld [vmem:[#allocation8 + $0x98] sm:$0xff]
    %v97 = vld [vmem:[#allocation8 + $0xe0] sm:$0xff]
    %v98 = vld [vmem:[#allocation8 + $0x128] sm:$0xff]
    %v99 = vld [vmem:[#allocation8 + $0x170] sm:$0xff]
    %v100 = vld [vmem:[#allocation8 + $0x1b8] sm:$0xff]
    %v101 = vld [vmem:[#allocation8 + $0x200] sm:$0xff]
    %v102 = vld [vmem:[#allocation8 + $0x248] sm:$0xff]
    %v103 = vld [vmem:[#allocation8 + $0x290] sm:$0xff]
    %v104 = vld [vmem:[#allocation8 + $0x2d8] sm:$0xff]
    %v105 = vld [vmem:[#allocation8 + $0x320] sm:$0xff]
    %v106 = vld [vmem:[#allocation8 + $0x368] sm:$0xff]
    %v107 = vld [vmem:[#allocation8 + $0x3b0] sm:$0xff]
    %v108 = vld [vmem:[#allocation8 + $0x3f8] sm:$0xff]
    %v109 = vld [vmem:[#allocation8 + $0x440] sm:$0xff]
    %110 = vmatprep.subr.mxu0 0.0
    %111 = vmatpush1.msra.mxu0 %v94
    %112 = vmatprep.subr.mxu0 0.0
    %113 = vmatpush1.msra.mxu0 %v95
    %114 = vmatprep.subr.mxu0 0.0
    %115 = vmatpush1.msra.mxu0 %v96
    %116 = vmatprep.subr.mxu0 0.0
    %117 = vmatpush1.msra.mxu0 %v97
    %118 = vmatprep.subr.mxu0 0.0
    %119 = vmatpush1.msra.mxu0 %v98
    %120 = vmatprep.subr.mxu0 0.0
    %121 = vmatpush1.msra.mxu0 %v99
    %122 = vmatprep.subr.mxu0 0.0
    %123 = vmatpush1.msra.mxu0 %v100
    %124 = vmatprep.subr.mxu0 0.0
    %125 = vmatpush1.msra.mxu0 %v101
    %126 = vmatprep.subr.mxu0 0.0
    %127 = vmatpush1.msra.mxu0 %v102
    %128 = vmatprep.subr.mxu0 0.0
    %129 = vmatpush1.msra.mxu0 %v103
    %130 = vmatprep.subr.mxu0 0.0
    %131 = vmatpush1.msra.mxu0 %v104
    %132 = vmatprep.subr.mxu0 0.0
    %133 = vmatpush1.msra.mxu0 %v105
    %134 = vmatprep.subr.mxu0 0.0
    %135 = vmatpush1.msra.mxu0 %v106
    %136 = vmatprep.subr.mxu0 0.0
    %137 = vmatpush1.msra.mxu0 %v107
    %138 = vmatprep.subr.mxu0 0.0
    %139 = vmatpush1.msra.mxu0 %v108
    %140 = vmatprep.subr.mxu0 0.0
    %141 = vmatpush1.msra.mxu0 %v109
    %142 = vmatprep.subr.mxu0 0.0
    %143 = vmatpush1.msra.mxu0 0.0
    %144 = vmatprep.subr.mxu0 0.0
    %145 = vmatpush1.msra.mxu0 0.0
    %146 = vmatprep.subr.mxu0 0.0
    %147 = vmatpush1.msra.mxu0 0.0
    %148 = vmatprep.subr.mxu0 0.0
    %149 = vmatpush1.msra.mxu0 0.0
    %150 = vmatprep.subr.mxu0 0.0
    %151 = vmatpush1.msra.mxu0 0.0
    %152 = vmatprep.subr.mxu0 0.0
    %153 = vmatpush1.msra.mxu0 0.0
    %154 = vmatprep.subr.mxu0 0.0
    %155 = vmatpush1.msra.mxu0 0.0
    %156 = vmatprep.subr.mxu0 0.0
    %157 = vmatpush1.msra.mxu0 0.0
    %158 = vmatprep.subr.mxu0 0.0
    %159 = vmatpush1.msra.mxu0 0.0
    %160 = vmatprep.subr.mxu0 0.0
    %161 = vmatpush1.msra.mxu0 0.0
    %162 = vmatprep.subr.mxu0 0.0
    %163 = vmatpush1.msra.mxu0 0.0
    %164 = vmatprep.subr.mxu0 0.0
    %165 = vmatpush1.msra.mxu0 0.0
    %166 = vmatprep.subr.mxu0 0.0
    %167 = vmatpush1.msra.mxu0 0.0
    %168 = vmatprep.subr.mxu0 0.0
    %169 = vmatpush1.msra.mxu0 0.0
    %170 = vmatprep.subr.mxu0 0.0
    %171 = vmatpush1.msra.mxu0 0.0
    %172 = vmatprep.subr.mxu0 0.0
    %173 = vmatpush1.msra.mxu0 0.0
    %174 = vmatprep.mubr.f32.mxu0 0.0
    %175 = vmatmul.mubr.f32.gmra.mrb[0].mxu0 %v93
    %v176 = vpop.f32.mrb[0].mxu0
    %v177 = vadd.f32 0.0, %v176
    %v178 = vpop.f32.mrb[0].mxu0
    %179 = vdwg.mxu0
    %180 = vmatprep.subr.mxu0 0.0
    %181 = vmatpush1.msra.mxu0 %v77
    %182 = vmatprep.subr.mxu0 0.0
    %183 = vmatpush1.msra.mxu0 %v78
    %184 = vmatprep.subr.mxu0 0.0
    %185 = vmatpush1.msra.mxu0 %v79
    %186 = vmatprep.subr.mxu0 0.0
    %187 = vmatpush1.msra.mxu0 %v80
    %188 = vmatprep.subr.mxu0 0.0
    %189 = vmatpush1.msra.mxu0 %v81
    %190 = vmatprep.subr.mxu0 0.0
    %191 = vmatpush1.msra.mxu0 %v82
    %192 = vmatprep.subr.mxu0 0.0
    %193 = vmatpush1.msra.mxu0 %v83
    %194 = vmatprep.subr.mxu0 0.0
    %195 = vmatpush1.msra.mxu0 %v84
    %196 = vmatprep.subr.mxu0 0.0
    %197 = vmatpush1.msra.mxu0 %v85
    %198 = vmatprep.subr.mxu0 0.0
    %199 = vmatpush1.msra.mxu0 %v86
    %200 = vmatprep.subr.mxu0 0.0
    %201 = vmatpush1.msra.mxu0 %v87
    %202 = vmatprep.subr.mxu0 0.0
    %203 = vmatpush1.msra.mxu0 %v88
    %204 = vmatprep.subr.mxu0 0.0
    %205 = vmatpush1.msra.mxu0 %v89
    %206 = vmatprep.subr.mxu0 0.0
    %207 = vmatpush1.msra.mxu0 %v90
    %208 = vmatprep.subr.mxu0 0.0
    %209 = vmatpush1.msra.mxu0 %v91
    %210 = vmatprep.subr.mxu0 0.0
    %211 = vmatpush1.msra.mxu0 %v92
    %212 = vmatprep.subr.mxu0 0.0
    %213 = vmatpush1.msra.mxu0 0.0
    %214 = vmatprep.subr.mxu0 0.0
    %215 = vmatpush1.msra.mxu0 0.0
    %216 = vmatprep.subr.mxu0 0.0
    %217 = vmatpush1.msra.mxu0 0.0
    %218 = vmatprep.subr.mxu0 0.0
    %219 = vmatpush1.msra.mxu0 0.0
    %220 = vmatprep.subr.mxu0 0.0
    %221 = vmatpush1.msra.mxu0 0.0
    %222 = vmatprep.subr.mxu0 0.0
    %223 = vmatpush1.msra.mxu0 0.0
    %224 = vmatprep.subr.mxu0 0.0
    %225 = vmatpush1.msra.mxu0 0.0
    %226 = vmatprep.subr.mxu0 0.0
    %227 = vmatpush1.msra.mxu0 0.0
    %228 = vmatprep.subr.mxu0 0.0
    %229 = vmatpush1.msra.mxu0 0.0
    %230 = vmatprep.subr.mxu0 0.0
    %231 = vmatpush1.msra.mxu0 0.0
    %232 = vmatprep.subr.mxu0 0.0
    %233 = vmatpush1.msra.mxu0 0.0
    %234 = vmatprep.subr.mxu0 0.0
    %235 = vmatpush1.msra.mxu0 0.0
    %236 = vmatprep.subr.mxu0 0.0
    %237 = vmatpush1.msra.mxu0 0.0
    %238 = vmatprep.subr.mxu0 0.0
    %239 = vmatpush1.msra.mxu0 0.0
    %240 = vmatprep.subr.mxu0 0.0
    %241 = vmatpush1.msra.mxu0 0.0
    %242 = vmatprep.subr.mxu0 0.0
    %243 = vmatpush1.msra.mxu0 0.0
    %244 = vmatprep.mubr.f32.mxu0 0.0
    %245 = vmatmul.mubr.f32.gmra.mrb[0].mxu0 %v76
    %v246 = vpop.f32.mrb[0].mxu0
    %v247 = vadd.f32 %v177, %v246
    %v248 = vpop.f32.mrb[0].mxu0
    %249 = vdwg.mxu0
    %v250 = vld [vmem:[%s4] sm:$0x1]
    %v251 = vlaneseq
    %v252 = vshrl.u32 %v251, 7
    %v253 = vsub.s32 0, %v252
    %v254 = vrot.slane %v250, %v253
    %v255 = vadd.f32 %v247, %v254
    %256 = vadd.xlane.f32.xlu0 %v255
    %v257 = vpop.xlane.xlu0 %256
    %v258 = vmul.f32 %v257, 0.03125
    %v259 = vmul.f32 %v255, %v255
    %260 = vadd.xlane.f32.xlu0 %v259
    %v261 = vpop.xlane.xlu0 %260
    %v262 = vmul.f32 %v261, 0.03125
    %v263 = vmul.f32 %v258, %v258
    %v264 = vsub.f32 %v262, %v263
    %v265 = vsub.f32 %v255, %v258
    %v266 = vadd.f32 %v264, 1e-05
    %v267 = vrsqrt.pop %v266
    %v268 = vmul.f32 %v265, %v267
    %v269 = vlaneseq
    %v270 = vshrl.u32 %v269, 7
    %v271 = vsub.s32 0, %v270
    %v272 = vrot.slane %v73, %v271
    %v273 = vmul.f32 %v268, %v272
    %v274 = vlaneseq
    %v275 = vshrl.u32 %v274, 7
    %v276 = vsub.s32 0, %v275
    %v277 = vrot.slane %v74, %v276
    %v278 = vadd.f32 %v273, %v277
    %v279 = vld [vmem:[#allocation8 + $0x10] sm:$0xff]
    %v280 = vld [vmem:[#allocation8 + $0x18] sm:$0xff]
    %v281 = vld [vmem:[#allocation8 + $0x20] sm:$0xff]
    %v282 = vld [vmem:[#allocation8 + $0x58] sm:$0xff]
    %v283 = vld [vmem:[#allocation8 + $0x60] sm:$0xff]
    %v284 = vld [vmem:[#allocation8 + $0x68] sm:$0xff]
    %v285 = vld [vmem:[#allocation8 + $0xa0] sm:$0xff]
    %v286 = vld [vmem:[#allocation8 + $0xa8] sm:$0xff]
    %v287 = vld [vmem:[#allocation8 + $0xb0] sm:$0xff]
    %v288 = vld [vmem:[#allocation8 + $0xe8] sm:$0xff]
    %v289 = vld [vmem:[#allocation8 + $0xf0] sm:$0xff]
    %v290 = vld [vmem:[#allocation8 + $0xf8] sm:$0xff]
    %v291 = vld [vmem:[#allocation8 + $0x130] sm:$0xff]
    %v292 = vld [vmem:[#allocation8 + $0x138] sm:$0xff]
    %v293 = vld [vmem:[#allocation8 + $0x140] sm:$0xff]
    %v294 = vld [vmem:[#allocation8 + $0x178] sm:$0xff]
    %v295 = vld [vmem:[#allocation8 + $0x180] sm:$0xff]
    %v296 = vld [vmem:[#allocation8 + $0x188] sm:$0xff]
    %v297 = vld [vmem:[#allocation8 + $0x1c0] sm:$0xff]
    %v298 = vld [vmem:[#allocation8 + $0x1c8] sm:$0xff]
    %v299 = vld [vmem:[#allocation8 + $0x1d0] sm:$0xff]
    %v300 = vld [vmem:[#allocation8 + $0x208] sm:$0xff]
    %v301 = vld [vmem:[#allocation8 + $0x210] sm:$0xff]
    %v302 = vld [vmem:[#allocation8 + $0x218] sm:$0xff]
    %v303 = vld [vmem:[#allocation8 + $0x250] sm:$0xff]
    %v304 = vld [vmem:[#allocation8 + $0x258] sm:$0xff]
    %v305 = vld [vmem:[#allocation8 + $0x260] sm:$0xff]
    %v306 = vld [vmem:[#allocation8 + $0x298] sm:$0xff]
    %v307 = vld [vmem:[#allocation8 + $0x2a0] sm:$0xff]
    %v308 = vld [vmem:[#allocation8 + $0x2a8] sm:$0xff]
    %v309 = vld [vmem:[#allocation8 + $0x2e0] sm:$0xff]
    %v310 = vld [vmem:[#allocation8 + $0x2e8] sm:$0xff]
    %v311 = vld [vmem:[#allocation8 + $0x2f0] sm:$0xff]
    %v312 = vld [vmem:[#allocation8 + $0x328] sm:$0xff]
    %v313 = vld [vmem:[#allocation8 + $0x330] sm:$0xff]
    %v314 = vld [vmem:[#allocation8 + $0x338] sm:$0xff]
    %v315 = vld [vmem:[#allocation8 + $0x370] sm:$0xff]
    %v316 = vld [vmem:[#allocation8 + $0x378] sm:$0xff]
    %v317 = vld [vmem:[#allocation8 + $0x380] sm:$0xff]
    %v318 = vld [vmem:[#allocation8 + $0x3b8] sm:$0xff]
    %v319 = vld [vmem:[#allocation8 + $0x3c0] sm:$0xff]
    %v320 = vld [vmem:[#allocation8 + $0x3c8] sm:$0xff]
    %v321 = vld [vmem:[#allocation8 + $0x400] sm:$0xff]
    %v322 = vld [vmem:[#allocation8 + $0x408] sm:$0xff]
    %v323 = vld [vmem:[#allocation8 + $0x410] sm:$0xff]
    %v324 = vld [vmem:[#allocation8 + $0x448] sm:$0xff]
    %v325 = vld [vmem:[#allocation8 + $0x450] sm:$0xff]
    %v326 = vld [vmem:[#allocation8 + $0x458] sm:$0xff]
    %327 = vmatprep.subr.mxu0 %v280
    %328 = vmatpush1.msra.mxu0 %v279
    %329 = vmatprep.subr.mxu0 %v283
    %330 = vmatpush1.msra.mxu0 %v282
    %331 = vmatprep.subr.mxu0 %v286
    %332 = vmatpush1.msra.mxu0 %v285
    %333 = vmatprep.subr.mxu0 %v289
    %334 = vmatpush1.msra.mxu0 %v288
    %335 = vmatprep.subr.mxu0 %v292
    %336 = vmatpush1.msra.mxu0 %v291
    %337 = vmatprep.subr.mxu0 %v295
    %338 = vmatpush1.msra.mxu0 %v294
    %339 = vmatprep.subr.mxu0 %v298
    %340 = vmatpush1.msra.mxu0 %v297
    %341 = vmatprep.subr.mxu0 %v301
    %342 = vmatpush1.msra.mxu0 %v300
    %343 = vmatprep.subr.mxu0 %v304
    %344 = vmatpush1.msra.mxu0 %v303
    %345 = vmatprep.subr.mxu0 %v307
    %346 = vmatpush1.msra.mxu0 %v306
    %347 = vmatprep.subr.mxu0 %v310
    %348 = vmatpush1.msra.mxu0 %v309
    %349 = vmatprep.subr.mxu0 %v313
    %350 = vmatpush1.msra.mxu0 %v312
    %351 = vmatprep.subr.mxu0 %v316
    %352 = vmatpush1.msra.mxu0 %v315
    %353 = vmatprep.subr.mxu0 %v319
    %354 = vmatpush1.msra.mxu0 %v318
    %355 = vmatprep.subr.mxu0 %v322
    %356 = vmatpush1.msra.mxu0 %v321
    %357 = vmatprep.subr.mxu0 %v325
    %358 = vmatpush1.msra.mxu0 %v324
    %359 = vmatprep.subr.mxu0 0.0
    %360 = vmatpush1.msra.mxu0 0.0
    %361 = vmatprep.subr.mxu0 0.0
    %362 = vmatpush1.msra.mxu0 0.0
    %363 = vmatprep.subr.mxu0 0.0
    %364 = vmatpush1.msra.mxu0 0.0
    %365 = vmatprep.subr.mxu0 0.0
    %366 = vmatpush1.msra.mxu0 0.0
    %367 = vmatprep.subr.mxu0 0.0
    %368 = vmatpush1.msra.mxu0 0.0
    %369 = vmatprep.subr.mxu0 0.0
    %370 = vmatpush1.msra.mxu0 0.0
    %371 = vmatprep.subr.mxu0 0.0
    %372 = vmatpush1.msra.mxu0 0.0
    %373 = vmatprep.subr.mxu0 0.0
    %374 = vmatpush1.msra.mxu0 0.0
    %375 = vmatprep.subr.mxu0 0.0
    %376 = vmatpush1.msra.mxu0 0.0
    %377 = vmatprep.subr.mxu0 0.0
    %378 = vmatpush1.msra.mxu0 0.0
    %379 = vmatprep.subr.mxu0 0.0
    %380 = vmatpush1.msra.mxu0 0.0
    %381 = vmatprep.subr.mxu0 0.0
    %382 = vmatpush1.msra.mxu0 0.0
    %383 = vmatprep.subr.mxu0 0.0
    %384 = vmatpush1.msra.mxu0 0.0
    %385 = vmatprep.subr.mxu0 0.0
    %386 = vmatpush1.msra.mxu0 0.0
    %387 = vmatprep.subr.mxu0 0.0
    %388 = vmatpush1.msra.mxu0 0.0
    %389 = vmatprep.subr.mxu0 0.0
    %390 = vmatpush1.msra.mxu0 0.0
    %391 = vmatprep.mubr.f32.mxu0 0.0
    %392 = vmatmul.mubr.f32.gmra.mrb[0].mxu0 %v278
    %v393 = vpop.f32.mrb[0].mxu0
    %v394 = vadd.f32 0.0, %v393
    %v395 = vpop.f32.mrb[0].mxu0
    %v396 = vadd.f32 0.0, %v395
    %397 = vdwg.mxu0
    %398 = vmatprep.subr.mxu0 0.0
    %399 = vmatpush1.msra.mxu0 %v281
    %400 = vmatprep.subr.mxu0 0.0
    %401 = vmatpush1.msra.mxu0 %v284
    %402 = vmatprep.subr.mxu0 0.0
    %403 = vmatpush1.msra.mxu0 %v287
    %404 = vmatprep.subr.mxu0 0.0
    %405 = vmatpush1.msra.mxu0 %v290
    %406 = vmatprep.subr.mxu0 0.0
    %407 = vmatpush1.msra.mxu0 %v293
    %408 = vmatprep.subr.mxu0 0.0
    %409 = vmatpush1.msra.mxu0 %v296
    %410 = vmatprep.subr.mxu0 0.0
    %411 = vmatpush1.msra.mxu0 %v299
    %412 = vmatprep.subr.mxu0 0.0
    %413 = vmatpush1.msra.mxu0 %v302
    %414 = vmatprep.subr.mxu0 0.0
    %415 = vmatpush1.msra.mxu0 %v305
    %416 = vmatprep.subr.mxu0 0.0
    %417 = vmatpush1.msra.mxu0 %v308
    %418 = vmatprep.subr.mxu0 0.0
    %419 = vmatpush1.msra.mxu0 %v311
    %420 = vmatprep.subr.mxu0 0.0
    %421 = vmatpush1.msra.mxu0 %v314
    %422 = vmatprep.subr.mxu0 0.0
    %423 = vmatpush1.msra.mxu0 %v317
    %424 = vmatprep.subr.mxu0 0.0
    %425 = vmatpush1.msra.mxu0 %v320
    %426 = vmatprep.subr.mxu0 0.0
    %427 = vmatpush1.msra.mxu0 %v323
    %428 = vmatprep.subr.mxu0 0.0
    %429 = vmatpush1.msra.mxu0 %v326
    %430 = vmatprep.subr.mxu0 0.0
    %431 = vmatpush1.msra.mxu0 0.0
    %432 = vmatprep.subr.mxu0 0.0
    %433 = vmatpush1.msra.mxu0 0.0
    %434 = vmatprep.subr.mxu0 0.0
    %435 = vmatpush1.msra.mxu0 0.0
    %436 = vmatprep.subr.mxu0 0.0
    %437 = vmatpush1.msra.mxu0 0.0
    %438 = vmatprep.subr.mxu0 0.0
    %439 = vmatpush1.msra.mxu0 0.0
    %440 = vmatprep.subr.mxu0 0.0
    %441 = vmatpush1.msra.mxu0 0.0
    %442 = vmatprep.subr.mxu0 0.0
    %443 = vmatpush1.msra.mxu0 0.0
    %444 = vmatprep.subr.mxu0 0.0
    %445 = vmatpush1.msra.mxu0 0.0
    %446 = vmatprep.subr.mxu0 0.0
    %447 = vmatpush1.msra.mxu0 0.0
    %448 = vmatprep.subr.mxu0 0.0
    %449 = vmatpush1.msra.mxu0 0.0
    %450 = vmatprep.subr.mxu0 0.0
    %451 = vmatpush1.msra.mxu0 0.0
    %452 = vmatprep.subr.mxu0 0.0
    %453 = vmatpush1.msra.mxu0 0.0
    %454 = vmatprep.subr.mxu0 0.0
    %455 = vmatpush1.msra.mxu0 0.0
    %456 = vmatprep.subr.mxu0 0.0
    %457 = vmatpush1.msra.mxu0 0.0
    %458 = vmatprep.subr.mxu0 0.0
    %459 = vmatpush1.msra.mxu0 0.0
    %460 = vmatprep.subr.mxu0 0.0
    %461 = vmatpush1.msra.mxu0 0.0
    %462 = vmatprep.mubr.f32.mxu0 0.0
    %463 = vmatmul.mubr.f32.gmra.mrb[0].mxu0 %v278
    %v464 = vpop.f32.mrb[0].mxu0
    %v465 = vadd.f32 0.0, %v464
    %v466 = vpop.f32.mrb[0].mxu0
    %467 = vdwg.mxu0
    %v468 = vld [vmem:[#allocation8 + $0x28] sm:$0xff]
    %v469 = vld [vmem:[#allocation8 + $0x30] sm:$0xff]
    %v470 = vld [vmem:[#allocation8 + $0x38] sm:$0xff]
    %v471 = vld [vmem:[#allocation8 + $0x70] sm:$0xff]
    %v472 = vld [vmem:[#allocation8 + $0x78] sm:$0xff]
    %v473 = vld [vmem:[#allocation8 + $0x80] sm:$0xff]
    %v474 = vld [vmem:[#allocation8 + $0xb8] sm:$0xff]
    %v475 = vld [vmem:[#allocation8 + $0xc0] sm:$0xff]
    %v476 = vld [vmem:[#allocation8 + $0xc8] sm:$0xff]
    %v477 = vld [vmem:[#allocation8 + $0x100] sm:$0xff]
    %v478 = vld [vmem:[#allocation8 + $0x108] sm:$0xff]
    %v479 = vld [vmem:[#allocation8 + $0x110] sm:$0xff]
    %v480 = vld [vmem:[#allocation8 + $0x148] sm:$0xff]
    %v481 = vld [vmem:[#allocation8 + $0x150] sm:$0xff]
    %v482 = vld [vmem:[#allocation8 + $0x158] sm:$0xff]
    %v483 = vld [vmem:[#allocation8 + $0x190] sm:$0xff]
    %v484 = vld [vmem:[#allocation8 + $0x198] sm:$0xff]
    %v485 = vld [vmem:[#allocation8 + $0x1a0] sm:$0xff]
    %v486 = vld [vmem:[#allocation8 + $0x1d8] sm:$0xff]
    %v487 = vld [vmem:[#allocation8 + $0x1e0] sm:$0xff]
    %v488 = vld [vmem:[#allocation8 + $0x1e8] sm:$0xff]
    %v489 = vld [vmem:[#allocation8 + $0x220] sm:$0xff]
    %v490 = vld [vmem:[#allocation8 + $0x228] sm:$0xff]
    %v491 = vld [vmem:[#allocation8 + $0x230] sm:$0xff]
    %v492 = vld [vmem:[#allocation8 + $0x268] sm:$0xff]
    %v493 = vld [vmem:[#allocation8 + $0x270] sm:$0xff]
    %v494 = vld [vmem:[#allocation8 + $0x278] sm:$0xff]
    %v495 = vld [vmem:[#allocation8 + $0x2b0] sm:$0xff]
    %v496 = vld [vmem:[#allocation8 + $0x2b8] sm:$0xff]
    %v497 = vld [vmem:[#allocation8 + $0x2c0] sm:$0xff]
    %v498 = vld [vmem:[#allocation8 + $0x2f8] sm:$0xff]
    %v499 = vld [vmem:[#allocation8 + $0x300] sm:$0xff]
    %v500 = vld [vmem:[#allocation8 + $0x308] sm:$0xff]
    %v501 = vld [vmem:[#allocation8 + $0x340] sm:$0xff]
    %v502 = vld [vmem:[#allocation8 + $0x348] sm:$0xff]
    %v503 = vld [vmem:[#allocation8 + $0x350] sm:$0xff]
    %v504 = vld [vmem:[#allocation8 + $0x388] sm:$0xff]
    %v505 = vld [vmem:[#allocation8 + $0x390] sm:$0xff]
    %v506 = vld [vmem:[#allocation8 + $0x398] sm:$0xff]
    %v507 = vld [vmem:[#allocation8 + $0x3d0] sm:$0xff]
    %v508 = vld [vmem:[#allocation8 + $0x3d8] sm:$0xff]
    %v509 = vld [vmem:[#allocation8 + $0x3e0] sm:$0xff]
    %v510 = vld [vmem:[#allocation8 + $0x418] sm:$0xff]
    %v511 = vld [vmem:[#allocation8 + $0x420] sm:$0xff]
    %v512 = vld [vmem:[#allocation8 + $0x428] sm:$0xff]
    %v513 = vld [vmem:[#allocation8 + $0x460] sm:$0xff]
    %v514 = vld [vmem:[#allocation8 + $0x468] sm:$0xff]
    %v515 = vld [vmem:[#allocation8 + $0x470] sm:$0xff]
    %516 = vmatprep.subr.mxu0 %v469
    %517 = vmatpush1.msra.mxu0 %v468
    %518 = vmatprep.subr.mxu0 %v472
    %519 = vmatpush1.msra.mxu0 %v471
    %520 = vmatprep.subr.mxu0 %v475
    %521 = vmatpush1.msra.mxu0 %v474
    %522 = vmatprep.subr.mxu0 %v478
    %523 = vmatpush1.msra.mxu0 %v477
    %524 = vmatprep.subr.mxu0 %v481
    %525 = vmatpush1.msra.mxu0 %v480
    %526 = vmatprep.subr.mxu0 %v484
    %527 = vmatpush1.msra.mxu0 %v483
    %528 = vmatprep.subr.mxu0 %v487
    %529 = vmatpush1.msra.mxu0 %v486
    %530 = vmatprep.subr.mxu0 %v490
    %531 = vmatpush1.msra.mxu0 %v489
    %532 = vmatprep.subr.mxu0 %v493
    %533 = vmatpush1.msra.mxu0 %v492
    %534 = vmatprep.subr.mxu0 %v496
    %535 = vmatpush1.msra.mxu0 %v495
    %536 = vmatprep.subr.mxu0 %v499
    %537 = vmatpush1.msra.mxu0 %v498
    %538 = vmatprep.subr.mxu0 %v502
    %539 = vmatpush1.msra.mxu0 %v501
    %540 = vmatprep.subr.mxu0 %v505
    %541 = vmatpush1.msra.mxu0 %v504
    %542 = vmatprep.subr.mxu0 %v508
    %543 = vmatpush1.msra.mxu0 %v507
    %544 = vmatprep.subr.mxu0 %v511
    %545 = vmatpush1.msra.mxu0 %v510
    %546 = vmatprep.subr.mxu0 %v514
    %547 = vmatpush1.msra.mxu0 %v513
    %548 = vmatprep.subr.mxu0 0.0
    %549 = vmatpush1.msra.mxu0 0.0
    %550 = vmatprep.subr.mxu0 0.0
    %551 = vmatpush1.msra.mxu0 0.0
    %552 = vmatprep.subr.mxu0 0.0
    %553 = vmatpush1.msra.mxu0 0.0
    %554 = vmatprep.subr.mxu0 0.0
    %555 = vmatpush1.msra.mxu0 0.0
    %556 = vmatprep.subr.mxu0 0.0
    %557 = vmatpush1.msra.mxu0 0.0
    %558 = vmatprep.subr.mxu0 0.0
    %559 = vmatpush1.msra.mxu0 0.0
    %560 = vmatprep.subr.mxu0 0.0
    %561 = vmatpush1.msra.mxu0 0.0
    %562 = vmatprep.subr.mxu0 0.0
    %563 = vmatpush1.msra.mxu0 0.0
    %564 = vmatprep.subr.mxu0 0.0
    %565 = vmatpush1.msra.mxu0 0.0
    %566 = vmatprep.subr.mxu0 0.0
    %567 = vmatpush1.msra.mxu0 0.0
    %568 = vmatprep.subr.mxu0 0.0
    %569 = vmatpush1.msra.mxu0 0.0
    %570 = vmatprep.subr.mxu0 0.0
    %571 = vmatpush1.msra.mxu0 0.0
    %572 = vmatprep.subr.mxu0 0.0
    %573 = vmatpush1.msra.mxu0 0.0
    %574 = vmatprep.subr.mxu0 0.0
    %575 = vmatpush1.msra.mxu0 0.0
    %576 = vmatprep.subr.mxu0 0.0
    %577 = vmatpush1.msra.mxu0 0.0
    %578 = vmatprep.subr.mxu0 0.0
    %579 = vmatpush1.msra.mxu0 0.0
    %580 = vmatprep.mubr.f32.mxu0 0.0
    %581 = vmatmul.mubr.f32.gmra.mrb[0].mxu0 %v75
    %v582 = vpop.f32.mrb[0].mxu0
    %v583 = vadd.f32 0.0, %v582
    %v584 = vpop.f32.mrb[0].mxu0
    %v585 = vadd.f32 0.0, %v584
    %586 = vdwg.mxu0
    %587 = vmatprep.subr.mxu0 0.0
    %588 = vmatpush1.msra.mxu0 %v470
    %589 = vmatprep.subr.mxu0 0.0
    %590 = vmatpush1.msra.mxu0 %v473
    %591 = vmatprep.subr.mxu0 0.0
    %592 = vmatpush1.msra.mxu0 %v476
    %593 = vmatprep.subr.mxu0 0.0
    %594 = vmatpush1.msra.mxu0 %v479
    %595 = vmatprep.subr.mxu0 0.0
    %596 = vmatpush1.msra.mxu0 %v482
    %597 = vmatprep.subr.mxu0 0.0
    %598 = vmatpush1.msra.mxu0 %v485
    %599 = vmatprep.subr.mxu0 0.0
    %600 = vmatpush1.msra.mxu0 %v488
    %601 = vmatprep.subr.mxu0 0.0
    %602 = vmatpush1.msra.mxu0 %v491
    %603 = vmatprep.subr.mxu0 0.0
    %604 = vmatpush1.msra.mxu0 %v494
    %605 = vmatprep.subr.mxu0 0.0
    %606 = vmatpush1.msra.mxu0 %v497
    %607 = vmatprep.subr.mxu0 0.0
    %608 = vmatpush1.msra.mxu0 %v500
    %609 = vmatprep.subr.mxu0 0.0
    %610 = vmatpush1.msra.mxu0 %v503
    %611 = vmatprep.subr.mxu0 0.0
    %612 = vmatpush1.msra.mxu0 %v506
    %613 = vmatprep.subr.mxu0 0.0
    %614 = vmatpush1.msra.mxu0 %v509
    %615 = vmatprep.subr.mxu0 0.0
    %616 = vmatpush1.msra.mxu0 %v512
    %617 = vmatprep.subr.mxu0 0.0
    %618 = vmatpush1.msra.mxu0 %v515
    %619 = vmatprep.subr.mxu0 0.0
    %620 = vmatpush1.msra.mxu0 0.0
    %621 = vmatprep.subr.mxu0 0.0
    %622 = vmatpush1.msra.mxu0 0.0
    %623 = vmatprep.subr.mxu0 0.0
    %624 = vmatpush1.msra.mxu0 0.0
    %625 = vmatprep.subr.mxu0 0.0
    %626 = vmatpush1.msra.mxu0 0.0
    %627 = vmatprep.subr.mxu0 0.0
    %628 = vmatpush1.msra.mxu0 0.0
    %629 = vmatprep.subr.mxu0 0.0
    %630 = vmatpush1.msra.mxu0 0.0
    %631 = vmatprep.subr.mxu0 0.0
    %632 = vmatpush1.msra.mxu0 0.0
    %633 = vmatprep.subr.mxu0 0.0
    %634 = vmatpush1.msra.mxu0 0.0
    %635 = vmatprep.subr.mxu0 0.0
    %636 = vmatpush1.msra.mxu0 0.0
    %637 = vmatprep.subr.mxu0 0.0
    %638 = vmatpush1.msra.mxu0 0.0
    %639 = vmatprep.subr.mxu0 0.0
    %640 = vmatpush1.msra.mxu0 0.0
    %641 = vmatprep.subr.mxu0 0.0
    %642 = vmatpush1.msra.mxu0 0.0
    %643 = vmatprep.subr.mxu0 0.0
    %644 = vmatpush1.msra.mxu0 0.0
    %645 = vmatprep.subr.mxu0 0.0
    %646 = vmatpush1.msra.mxu0 0.0
    %647 = vmatprep.subr.mxu0 0.0
    %648 = vmatpush1.msra.mxu0 0.0
    %649 = vmatprep.subr.mxu0 0.0
    %650 = vmatpush1.msra.mxu0 0.0
    %651 = vmatprep.mubr.f32.mxu0 0.0
    %652 = vmatmul.mubr.f32.gmra.mrb[0].mxu0 %v75
    %v653 = vpop.f32.mrb[0].mxu0
    %v654 = vadd.f32 0.0, %v653
    %v655 = vpop.f32.mrb[0].mxu0
    %656 = vdwg.mxu0
    %v657 = vadd.f32 %v394, %v583
    %v658 = vld [vmem:[%s4 + $0x1] sm:$0x1]
    %v659 = vlaneseq
    %v660 = vshrl.u32 %v659, 7
    %v661 = vsub.s32 0, %v660
    %v662 = vrot.slane %v658, %v661
    %v663 = vadd.f32 %v657, %v662
    %v664 = vxor.u32 %v663, 2147483648
    %v665 = vmul.f32 %v664, 1.442695
    %v666 = vpow.pop %v665
    %v667 = vadd.f32 %v666, 1.0
    %v668 = vrcp.pop %v667
    %v669 = vmul.f32 1.0, %v668
    %v670 = vadd.f32 %v396, %v585
    %v671 = vld [vmem:[%s4 + $0x2] sm:$0x1]
    %v672 = vlaneseq
    %v673 = vshrl.u32 %v672, 7
    %v674 = vsub.s32 0, %v673
    %v675 = vrot.slane %v671, %v674
    %v676 = vadd.f32 %v670, %v675
    %v677 = vxor.u32 %v676, 2147483648
    %v678 = vmul.f32 %v677, 1.442695
    %v679 = vpow.pop %v678
    %v680 = vadd.f32 %v679, 1.0
    %v681 = vrcp.pop %v680
    %v682 = vmul.f32 1.0, %v681
    %v683 = vld [vmem:[%s4 + $0x3] sm:$0x1]
    %v684 = vlaneseq
    %v685 = vshrl.u32 %v684, 7
    %v686 = vsub.s32 0, %v685
    %v687 = vrot.slane %v683, %v686
    %v688 = vadd.f32 %v465, %v687
    %v689 = vld [vmem:[%s4 + $0x4] sm:$0x1]
    %v690 = vlaneseq
    %v691 = vshrl.u32 %v690, 7
    %v692 = vsub.s32 0, %v691
    %v693 = vrot.slane %v689, %v692
    %v694 = vadd.f32 %v654, %v693
    %v695 = vmul.f32 %v669, %v694
    %v696 = vadd.f32 %v688, %v695
    %v697 = vtanh.pop %v696
    %v698 = vsub.f32 1.0, %v682
    %v699 = vmul.f32 %v698, %v697
    %v700 = vmul.f32 %v682, %v75
    %v701 = vadd.f32 %v699, %v700
    %702 = vadd.xlane.f32.xlu0 %v701
    %v703 = vpop.xlane.xlu0 %702
    %v704 = vmul.f32 %v703, 0.03125
    %v705 = vmul.f32 %v701, %v701
    %706 = vadd.xlane.f32.xlu0 %v705
    %v707 = vpop.xlane.xlu0 %706
    %v708 = vmul.f32 %v707, 0.03125
    %v709 = vmul.f32 %v704, %v704
    %v710 = vsub.f32 %v708, %v709
    %v711 = vsub.f32 %v701, %v704
    %v712 = vadd.f32 %v710, 1e-05
    %v713 = vrsqrt.pop %v712
    %v714 = vmul.f32 %v711, %v713
    %v715 = vmul.f32 %v714, %v272
    %v716 = vadd.f32 %v715, %v277
    %v717 = vld [vmem:[#allocation8 + $0x40] sm:$0xff]
    %v718 = vld [vmem:[#allocation8 + $0x88] sm:$0xff]
    %v719 = vld [vmem:[#allocation8 + $0xd0] sm:$0xff]
    %v720 = vld [vmem:[#allocation8 + $0x118] sm:$0xff]
    %v721 = vld [vmem:[#allocation8 + $0x160] sm:$0xff]
    %v722 = vld [vmem:[#allocation8 + $0x1a8] sm:$0xff]
    %v723 = vld [vmem:[#allocation8 + $0x1f0] sm:$0xff]
    %v724 = vld [vmem:[#allocation8 + $0x238] sm:$0xff]
    %v725 = vld [vmem:[#allocation8 + $0x280] sm:$0xff]
    %v726 = vld [vmem:[#allocation8 + $0x2c8] sm:$0xff]
    %v727 = vld [vmem:[#allocation8 + $0x310] sm:$0xff]
    %v728 = vld [vmem:[#allocation8 + $0x358] sm:$0xff]
    %v729 = vld [vmem:[#allocation8 + $0x3a0] sm:$0xff]
    %v730 = vld [vmem:[#allocation8 + $0x3e8] sm:$0xff]
    %v731 = vld [vmem:[#allocation8 + $0x430] sm:$0xff]
    %v732 = vld [vmem:[#allocation8 + $0x478] sm:$0xff]
    %v733 = vld [vmem:[%s4 + $0x5] sm:$0x1]
    %v734 = vlaneseq
    %v735 = vshrl.u32 %v734, 7
    %v736 = vsub.s32 0, %v735
    %v737 = vrot.slane %v733, %v736
    %738 = vmatprep.subr.mxu0 0.0
    %739 = vmatpush1.msra.mxu0 %v717
    %740 = vmatprep.subr.mxu0 0.0
    %741 = vmatpush1.msra.mxu0 %v718
    %742 = vmatprep.subr.mxu0 0.0
    %743 = vmatpush1.msra.mxu0 %v719
    %744 = vmatprep.subr.mxu0 0.0
    %745 = vmatpush1.msra.mxu0 %v720
    %746 = vmatprep.subr.mxu0 0.0
    %747 = vmatpush1.msra.mxu0 %v721
    %748 = vmatprep.subr.mxu0 0.0
    %749 = vmatpush1.msra.mxu0 %v722
    %750 = vmatprep.subr.mxu0 0.0
    %751 = vmatpush1.msra.mxu0 %v723
    %752 = vmatprep.subr.mxu0 0.0
    %753 = vmatpush1.msra.mxu0 %v724
    %754 = vmatprep.subr.mxu0 0.0
    %755 = vmatpush1.msra.mxu0 %v725
    %756 = vmatprep.subr.mxu0 0.0
    %757 = vmatpush1.msra.mxu0 %v726
    %758 = vmatprep.subr.mxu0 0.0
    %759 = vmatpush1.msra.mxu0 %v727
    %760 = vmatprep.subr.mxu0 0.0
    %761 = vmatpush1.msra.mxu0 %v728
    %762 = vmatprep.subr.mxu0 0.0
    %763 = vmatpush1.msra.mxu0 %v729
    %764 = vmatprep.subr.mxu0 0.0
    %765 = vmatpush1.msra.mxu0 %v730
    %766 = vmatprep.subr.mxu0 0.0
    %767 = vmatpush1.msra.mxu0 %v731
    %768 = vmatprep.subr.mxu0 0.0
    %769 = vmatpush1.msra.mxu0 %v732
    %770 = vmatprep.subr.mxu0 0.0
    %771 = vmatpush1.msra.mxu0 0.0
    %772 = vmatprep.subr.mxu0 0.0
    %773 = vmatpush1.msra.mxu0 0.0
    %774 = vmatprep.subr.mxu0 0.0
    %775 = vmatpush1.msra.mxu0 0.0
    %776 = vmatprep.subr.mxu0 0.0
    %777 = vmatpush1.msra.mxu0 0.0
    %778 = vmatprep.subr.mxu0 0.0
    %779 = vmatpush1.msra.mxu0 0.0
    %780 = vmatprep.subr.mxu0 0.0
    %781 = vmatpush1.msra.mxu0 0.0
    %782 = vmatprep.subr.mxu0 0.0
    %783 = vmatpush1.msra.mxu0 0.0
    %784 = vmatprep.subr.mxu0 0.0
    %785 = vmatpush1.msra.mxu0 0.0
    %786 = vmatprep.subr.mxu0 0.0
    %787 = vmatpush1.msra.mxu0 0.0
    %788 = vmatprep.subr.mxu0 0.0
    %789 = vmatpush1.msra.mxu0 0.0
    %790 = vmatprep.subr.mxu0 0.0
    %791 = vmatpush1.msra.mxu0 0.0
    %792 = vmatprep.subr.mxu0 0.0
    %793 = vmatpush1.msra.mxu0 0.0
    %794 = vmatprep.subr.mxu0 0.0
    %795 = vmatpush1.msra.mxu0 0.0
    %796 = vmatprep.subr.mxu0 0.0
    %797 = vmatpush1.msra.mxu0 0.0
    %798 = vmatprep.subr.mxu0 0.0
    %799 = vmatpush1.msra.mxu0 0.0
    %800 = vmatprep.subr.mxu0 0.0
    %801 = vmatpush1.msra.mxu0 0.0
    %802 = vmatprep.mubr.f32.mxu0 0.0
    %803 = vmatmul.mubr.f32.gmra.mrb[0].mxu0 %v716
    %v804 = vpop.f32.mrb[0].mxu0
    %v805 = vadd.f32 %v737, %v804
    %v806 = vpop.f32.mrb[0].mxu0
    %807 = vdwg.mxu0
    %808 = vadd.xlane.f32.xlu0 %v805
    %v809 = vpop.xlane.xlu0 %808
    %v810 = vmul.f32 %v809, 0.03125
    %v811 = vmul.f32 %v805, %v805
    %812 = vadd.xlane.f32.xlu0 %v811
    %v813 = vpop.xlane.xlu0 %812
    %v814 = vmul.f32 %v813, 0.03125
    %v815 = vmul.f32 %v810, %v810
    %v816 = vsub.f32 %v814, %v815
    %v817 = vsub.f32 %v805, %v810
    %v818 = vadd.f32 %v816, 1e-05
    %v819 = vrsqrt.pop %v818
    %v820 = vmul.f32 %v817, %v819
    %v821 = vmul.f32 %v820, %v272
    %v822 = vadd.f32 %v821, %v277
    %823 = vst [vmem:[#allocation10] sm:$0xff] %v822
    %824 = vst [vmem:[#allocation11] sm:$0xff] %v716
    // Predicated region
    $region38: #{stage1_forward.1} parent=1 // pred_check
      _
    $region39: #{stage1_forward.1} parent=1 // pred_check_branch
      %826 = sbr.rel (0) target = $region41
    $region40: #{stage1_forward.1} parent=1 // pred_region
      %s828 = ssub.s32 128, 128
      %829 = vsyncadd [#allocation4], %s828
      %s831 = sshll.u32 [#allocation10], 4
      %s832 = int_to_ptr.vmem [resolvable:$true] %s831
      %834 = dma.vmem_to_hbm [thread:$0]  %s832, 128, %s5, [#allocation4]
    $region41: #{stage1_forward.1} parent=1 // pred_fallthru
      _
    // Predicated region
    $region42: #{stage1_forward.1} parent=1 // pred_check
      _
    $region43: #{stage1_forward.1} parent=1 // pred_check_branch
      %836 = sbr.rel (0) target = $region45
    $region44: #{stage1_forward.1} parent=1 // pred_region
      %s838 = ssub.s32 128, 128
      %839 = vsyncadd [#allocation12], %s838
      %s841 = sshll.u32 [#allocation11], 4
      %s842 = int_to_ptr.vmem [resolvable:$true] %s841
      %844 = dma.vmem_to_hbm [thread:$0]  %s842, 128, %s6, [#allocation12]
    $region45: #{stage1_forward.1} parent=1 // pred_fallthru
      _
    // Predicated region
    $region46: #{stage1_forward.1} parent=1 // pred_check
      _
    $region47: #{stage1_forward.1} parent=1 // pred_check_branch
      %846 = sbr.rel (0) target = $region49
    $region48: #{stage1_forward.1} parent=1 // pred_region
      %847 = dma.done [#allocation4], 128
    $region49: #{stage1_forward.1} parent=1 // pred_fallthru
      _
    // Predicated region
    $region50: #{stage1_forward.1} parent=1 // pred_check
      _
    $region51: #{stage1_forward.1} parent=1 // pred_check_branch
      %849 = sbr.rel (0) target = $region53
    $region52: #{stage1_forward.1} parent=1 // pred_region
      %850 = dma.done [#allocation12], 128
    $region53: #{stage1_forward.1} parent=1 // pred_fallthru
      _
    %851 = vsyncpa [#allocation3], 1
    %852 = vsyncpa [#allocation6], 1
    %853 = vsyncpa [#allocation9], 1
    %854 = vsyncpa [#allocation4], 1
    %855 = vsyncpa [#allocation12], 1

</llo_original>
